<compile_context>
chip_gen: v6e
topology: v6e:2x2x1
jax: 0.10.0
libtpu: 0.0.40
codegen_flags: <defaults>
</compile_context>

<pallas_src>
import jax
import jax.numpy as jnp
from jax.experimental import pallas as pl
from jax.experimental.pallas import tpu as pltpu

# ---------------- sizes & packed-slab layout ----------------
IN_F, H1, H2 = 1, 64, 32
ROW_W1, ROW_B1, ROW_B2, ROW_WM, ROW_BM = 0, 1, 2, 3, 4
ROW_W2 = 8                                  # sublane-aligned start of w2 block
SLAB_ROWS, SLAB_LANES = ROW_W2 + H1, H1     # (72, 64) f32 ~= 18 KB


def policy_kernel(x_ref, slab_ref, mean_ref):
    x = x_ref[...]                                   # (B, 1)

    # Static views into the packed parameter slab (zero-cost slicing).
    w1 = slab_ref[ROW_W1:ROW_W1 + 1, :]              # (1, 64)
    b1 = slab_ref[ROW_B1:ROW_B1 + 1, :]              # (1, 64)
    b2 = slab_ref[ROW_B2:ROW_B2 + 1, :]              # (1, 64) lanes 32.. are 0
    wm = slab_ref[ROW_WM:ROW_WM + 1, :]              # (1, 64) lanes 32.. are 0
    bm = slab_ref[ROW_BM:ROW_BM + 1, 0:1]            # (1, 1)
    w2 = slab_ref[ROW_W2:ROW_W2 + H1, :]             # (64, 64) cols 32.. are 0

    # fc1: K=1 contraction -> VPU broadcast multiply, skip the MXU.
    h1 = jnp.tanh(x * w1 + b1)                       # (B, 64)

    # fc2: the only real matmul (64-deep contraction) -> MXU.
    # Zero-padded w2 columns / b2 lanes make h2[:, 32:] exactly 0.
    h2 = jnp.tanh(
        jnp.dot(h1, w2, preferred_element_type=jnp.float32) + b2)   # (B, 64)

    # mean head: N=1 output -> VPU multiply + lane reduction (XLU), skip MXU.
    mean_ref[...] = jnp.sum(h2 * wm, axis=-1, keepdims=True) + bm   # (B, 1)


def pack_params(w1, b1, w2, b2, wm, bm):
    """Pack all weights/biases into one zero-padded f32 slab (built once)."""
    slab = jnp.zeros((SLAB_ROWS, SLAB_LANES), jnp.float32)
    slab = slab.at[ROW_W1, :H1].set(w1.reshape(H1))
    slab = slab.at[ROW_B1, :H1].set(b1.reshape(H1))
    slab = slab.at[ROW_B2, :H2].set(b2.reshape(H2))
    slab = slab.at[ROW_WM, :H2].set(wm.reshape(H2))
    slab = slab.at[ROW_BM, 0].set(bm.reshape(()))
    slab = slab.at[ROW_W2:ROW_W2 + H1, :H2].set(w2)
    return slab


@jax.jit
def policy_forward(x, slab, log_std):
    """x: (B, 1) f32, slab: packed params. Returns (mean (B,1), std (1,))."""
    B = x.shape[0]
    vmem = pl.BlockSpec(memory_space=pltpu.MemorySpace.VMEM)
    cost = pl.CostEstimate(
        flops=2 * B * (IN_F * H1 + H1 * H2 + H2 * 1),
        transcendentals=B * (H1 + H2),
        bytes_accessed=4 * (x.size + SLAB_ROWS * SLAB_LANES + B),
    )
    mean = pl.pallas_call(
        policy_kernel,
        out_shape=jax.ShapeDtypeStruct((B, 1), jnp.float32),
        in_specs=[vmem, vmem],
        out_specs=vmem,
        cost_estimate=cost,
    )(x, slab)

    # std does not depend on x; keep it out of the per-call kernel.
    std = jnp.exp(log_std).reshape((1,))
    return mean, std


def init_params(key):
    """Deterministic init matching the PyTorch module's parameter shapes.

    fc1: Linear(1, 64), fc2: Linear(64, 32), mean: Linear(32, 1), log_std=0.
    Storage: w1 (1,64), w2 (64,32), wm (1,32) row; biases (1,out); bm (1,1).
    """
    k1, k2, k3, k4, k5, k6 = jax.random.split(key, 6)

    def uniform(k, shape, fan_in):
        bound = 1.0 / jnp.sqrt(jnp.float32(fan_in))
        return jax.random.uniform(k, shape, jnp.float32, -bound, bound)

    w1 = uniform(k1, (1, 64), 1)
    b1 = uniform(k2, (1, 64), 1)
    w2 = uniform(k3, (64, 32), 64)
    b2 = uniform(k4, (1, 32), 64)
    wm = uniform(k5, (1, 32), 32)
    bm = uniform(k6, (1, 1), 32)
    log_std = jnp.zeros((1, 1), jnp.float32)
    return (w1, b1, w2, b2, wm, bm, log_std)


def reference_forward(x, params):
    w1, b1, w2, b2, wm, bm, log_std = params
    h1 = jnp.tanh(x @ w1 + b1)                 # (B, 64)
    h2 = jnp.tanh(h1 @ w2 + b2)                # (B, 32)
    mean = h2 @ wm.T + bm                      # (B, 1)
    std = jnp.exp(log_std).reshape((1,))
    return mean, std


if __name__ == "__main__":
    key = jax.random.PRNGKey(0)
    pkey, xkey = jax.random.split(key)

    params = init_params(pkey)
    w1, b1, w2, b2, wm, bm, log_std = params
    slab = pack_params(w1, b1, w2, b2, wm, bm)          # built once, reused

    x = jax.random.normal(xkey, (8, 1), jnp.float32)    # batch=8, in_features=1

    mean, std = policy_forward(x, slab, log_std)
    jax.block_until_ready((mean, std))

    ref_mean, ref_std = reference_forward(x, params)
    assert mean.shape == (8, 1) and std.shape == (1,)
    assert jnp.allclose(mean, ref_mean, atol=1e-5, rtol=1e-5)
    assert jnp.allclose(std, ref_std, atol=1e-6, rtol=1e-6)

    print("KERNEL_OK")
</pallas_src>

<mosaic_0001>
module attributes {stable_mosaic.version = 11 : i64} {
  func.func @policy_kernel(%arg0: memref<8x1xf32, #tpu.memory_space<vmem>>, %arg1: memref<72x64xf32, #tpu.memory_space<vmem>>, %arg2: memref<8x1xf32, #tpu.memory_space<vmem>>) attributes {dimension_semantics = [], scalar_prefetch = 0 : i64, scratch_operands = 0 : i64, tpu.core_type = #tpu.core_type<tc>} {
    %c0 = arith.constant 0 : index
    %c0_0 = arith.constant 0 : index
    %0 = vector.load %arg0[%c0, %c0_0] : memref<8x1xf32, #tpu.memory_space<vmem>>, vector<8x1xf32>
    %c0_1 = arith.constant 0 : index
    %c0_2 = arith.constant 0 : index
    %1 = vector.load %arg1[%c0_1, %c0_2] : memref<72x64xf32, #tpu.memory_space<vmem>>, vector<1x64xf32>
    %c1 = arith.constant 1 : index
    %c0_3 = arith.constant 0 : index
    %2 = vector.load %arg1[%c1, %c0_3] : memref<72x64xf32, #tpu.memory_space<vmem>>, vector<1x64xf32>
    %c2 = arith.constant 2 : index
    %c0_4 = arith.constant 0 : index
    %3 = vector.load %arg1[%c2, %c0_4] : memref<72x64xf32, #tpu.memory_space<vmem>>, vector<1x64xf32>
    %c3 = arith.constant 3 : index
    %c0_5 = arith.constant 0 : index
    %4 = vector.load %arg1[%c3, %c0_5] : memref<72x64xf32, #tpu.memory_space<vmem>>, vector<1x64xf32>
    %c4 = arith.constant 4 : index
    %c0_6 = arith.constant 0 : index
    %5 = vector.load %arg1[%c4, %c0_6] : memref<72x64xf32, #tpu.memory_space<vmem>>, vector<1x1xf32>
    %c8 = arith.constant 8 : index
    %c0_7 = arith.constant 0 : index
    %6 = vector.load %arg1[%c8, %c0_7] : memref<72x64xf32, #tpu.memory_space<vmem>>, vector<64x64xf32>
    %7 = vector.broadcast %0 : vector<8x1xf32> to vector<8x64xf32>
    %8 = vector.broadcast %1 : vector<1x64xf32> to vector<8x64xf32>
    %9 = arith.mulf %7, %8 : vector<8x64xf32>
    %10 = vector.broadcast %2 : vector<1x64xf32> to vector<8x64xf32>
    %11 = arith.addf %9, %10 : vector<8x64xf32>
    %12 = math.tanh %11 : vector<8x64xf32>
    %cst = arith.constant dense<0.000000e+00> : vector<8x64xf32>
    %13 = tpu.matmul %12, %6, %cst {dimension_numbers = #tpu.dot_dimension_numbers<[1], [0], [0], [1], [0, 0, 1, 1], [], []>} : vector<8x64xf32>, vector<64x64xf32>, vector<8x64xf32> -> vector<8x64xf32>
    %14 = vector.broadcast %3 : vector<1x64xf32> to vector<8x64xf32>
    %15 = arith.addf %13, %14 : vector<8x64xf32>
    %16 = math.tanh %15 : vector<8x64xf32>
    %17 = vector.broadcast %4 : vector<1x64xf32> to vector<8x64xf32>
    %18 = arith.mulf %16, %17 : vector<8x64xf32>
    %cst_8 = arith.constant dense<0.000000e+00> : vector<8xf32>
    %19 = vector.multi_reduction <add>, %18, %cst_8 [1] : vector<8x64xf32> to vector<8xf32>
    %20 = vector.shape_cast %19 : vector<8xf32> to vector<8x1xf32>
    %21 = vector.broadcast %5 : vector<1x1xf32> to vector<8x1xf32>
    %22 = arith.addf %20, %21 : vector<8x1xf32>
    %c0_9 = arith.constant 0 : index
    %c0_10 = arith.constant 0 : index
    %23 = vector.load %arg2[%c0_9, %c0_10] : memref<8x1xf32, #tpu.memory_space<vmem>>, vector<8x1xf32>
    tpu.vector_store %arg2[%c0_9, %c0_10], %22 {strides = array<i32>} : memref<8x1xf32, #tpu.memory_space<vmem>>, vector<8x1xf32>,
    return
  }
}

</mosaic_0001>

<llo_original>
// kernel: policy_forward.1
$region0: #{policy_forward.1}
  #allocation0 [shape = 'u32[]', space=smem, size = 0x4, offset = 0x4, fixed_abs, tag = 'smem constant byte address 0x4 - core index']
  #allocation1 [shape = 'u32[144,128]{1,0:T(1,128)}', space=vmem, size = 0x12000, scoped, tag = 'internal scratch']
  %s0 = inlined_call_operand.vmem [shape: f32[8,1], index: 0, kind: input, shape index: {}]
  %s1 = inlined_call_operand.vmem [shape: f32[72,64], index: 1, kind: input, shape index: {}]
  %s2 = inlined_call_operand.vmem [shape: f32[8,1], index: 2, kind: output, shape index: {}]
  %s3 = sld [smem:[#allocation0]]
  $region18: #{policy_forward.1} parent=0
    _
  %s5 = ssub.s32 1, %s3
  %s6 = scalar_select 0, %s5, %s3
  // Predicated region
  $region2: #{policy_forward.1} parent=0 // pred_check
    _
  $region3: #{policy_forward.1} parent=0 // pred_check_branch
    %8 = sbr.rel (0) target = $region5
  $region4: #{policy_forward.1} parent=0 // pred_region
    _
  $region5: #{policy_forward.1} parent=0 // pred_fallthru
    _
  // Predicated region
  $region6: #{policy_forward.1} parent=0 // pred_check
    _
  $region7: #{policy_forward.1} parent=0 // pred_check_branch
    %10 = sbr.rel (0) target = $region9
  $region8: #{policy_forward.1} parent=0 // pred_region
    _
  $region9: #{policy_forward.1} parent=0 // pred_fallthru
    _
  %v11 = vld [vmem:[%s0] sm:$0xff]
  %v12 = vld [vmem:[%s1] sm:$0x1]
  %v13 = vld [vmem:[%s1 + $0x1] sm:$0x1]
  %v14 = vld [vmem:[%s1 + $0x2] sm:$0x1]
  %v15 = vld [vmem:[%s1 + $0x3] sm:$0x1]
  %v16 = vld [vmem:[%s1 + $0x4] sm:$0x1]
  %v17 = vld [vmem:[%s1 + $0x8] sm:$0xff]
  %v18 = vld [vmem:[%s1 + $0x10] sm:$0xff]
  %v19 = vld [vmem:[%s1 + $0x18] sm:$0xff]
  %v20 = vld [vmem:[%s1 + $0x20] sm:$0xff]
  %v21 = vld [vmem:[%s1 + $0x28] sm:$0xff]
  %v22 = vld [vmem:[%s1 + $0x30] sm:$0xff]
  %v23 = vld [vmem:[%s1 + $0x38] sm:$0xff]
  %v24 = vld [vmem:[%s1 + $0x40] sm:$0xff]
  %26 = vset.pattern.permute.xlu0 0
  %27 = vperm.xlu0 %26, %v11
  %v28 = vpop.permute.xlu0 %27
  %v30 = vlaneseq
  %v31 = vshrl.u32 %v30, 7
  %v32 = vsub.s32 0, %v31
  %v33 = vrot.slane %v12, %v32
  %v34 = vmul.f32 %v28, %v33
  %v35 = vlaneseq
  %v36 = vshrl.u32 %v35, 7
  %v37 = vsub.s32 0, %v36
  %v38 = vrot.slane %v13, %v37
  %v39 = vadd.f32 %v34, %v38
  %v40 = vtanh.pop %v39
  %v41 = vlaneseq
  %v42 = vshrl.u32 %v41, 7
  %v43 = vsub.s32 0, %v42
  %v44 = vrot.slane %v14, %v43
  %vm45 = vcmask 523264
  %v47 = vsel %vm45, %v40, 0
  %49 = vmatprep.subr.mxu0 0.0
  %50 = vmatpush1.msra.mxu0 0.0
  %51 = vmatprep.subr.mxu0 0.0
  %52 = vmatpush1.msra.mxu0 0.0
  %53 = vmatprep.subr.mxu0 0.0
  %54 = vmatpush1.msra.mxu0 0.0
  %55 = vmatprep.subr.mxu0 0.0
  %56 = vmatpush1.msra.mxu0 0.0
  %57 = vmatprep.subr.mxu0 0.0
  %58 = vmatpush1.msra.mxu0 0.0
  %59 = vmatprep.subr.mxu0 0.0
  %60 = vmatpush1.msra.mxu0 0.0
  %61 = vmatprep.subr.mxu0 0.0
  %62 = vmatpush1.msra.mxu0 0.0
  %63 = vmatprep.subr.mxu0 0.0
  %64 = vmatpush1.msra.mxu0 0.0
  %65 = vmatprep.subr.mxu0 0.0
  %66 = vmatpush1.msra.mxu0 %v24
  %67 = vmatprep.subr.mxu0 0.0
  %68 = vmatpush1.msra.mxu0 %v23
  %69 = vmatprep.subr.mxu0 0.0
  %70 = vmatpush1.msra.mxu0 %v22
  %71 = vmatprep.subr.mxu0 0.0
  %72 = vmatpush1.msra.mxu0 %v21
  %73 = vmatprep.subr.mxu0 0.0
  %74 = vmatpush1.msra.mxu0 %v20
  %75 = vmatprep.subr.mxu0 0.0
  %76 = vmatpush1.msra.mxu0 %v19
  %77 = vmatprep.subr.mxu0 0.0
  %78 = vmatpush1.msra.mxu0 %v18
  %79 = vmatprep.subr.mxu0 0.0
  %80 = vmatpush1.msra.mxu0 %v17
  %81 = vmatprep.subr.mxu0 0.0
  %82 = vmatpush2.msra.mxu0 0.0
  %83 = vmatprep.subr.mxu0 0.0
  %84 = vmatpush2.msra.mxu0 0.0
  %85 = vmatprep.subr.mxu0 0.0
  %86 = vmatpush2.msra.mxu0 0.0
  %87 = vmatprep.subr.mxu0 0.0
  %88 = vmatpush2.msra.mxu0 0.0
  %89 = vmatprep.subr.mxu0 0.0
  %90 = vmatpush2.msra.mxu0 0.0
  %91 = vmatprep.subr.mxu0 0.0
  %92 = vmatpush2.msra.mxu0 0.0
  %93 = vmatprep.subr.mxu0 0.0
  %94 = vmatpush2.msra.mxu0 0.0
  %95 = vmatprep.subr.mxu0 0.0
  %96 = vmatpush2.msra.mxu0 0.0
  %97 = vmatprep.subr.mxu0 0.0
  %98 = vmatpush2.msra.mxu0 0.0
  %99 = vmatprep.subr.mxu0 0.0
  %100 = vmatpush2.msra.mxu0 0.0
  %101 = vmatprep.subr.mxu0 0.0
  %102 = vmatpush2.msra.mxu0 0.0
  %103 = vmatprep.subr.mxu0 0.0
  %104 = vmatpush2.msra.mxu0 0.0
  %105 = vmatprep.subr.mxu0 0.0
  %106 = vmatpush2.msra.mxu0 0.0
  %107 = vmatprep.subr.mxu0 0.0
  %108 = vmatpush2.msra.mxu0 0.0
  %109 = vmatprep.subr.mxu0 0.0
  %110 = vmatpush2.msra.mxu0 0.0
  %111 = vmatprep.subr.mxu0 0.0
  %112 = vmatpush2.msra.mxu0 0.0
  %113 = vmatprep.mubr.f32.mxu0 0.0
  %114 = vmatmul.mubr.f32.gmra.mxu0 %v47
  %v115 = vpop.f32.mrf.mxu0
  %v116 = vadd.f32 %v44, %v115
  %v117 = vpop.f32.mrf.mxu0
  %118 = vdwg.mxu0
  %v119 = vtanh.pop %v116
  %v120 = vlaneseq
  %v121 = vshrl.u32 %v120, 7
  %v122 = vsub.s32 0, %v121
  %v123 = vrot.slane %v15, %v122
  %v124 = vmul.f32 %v119, %v123
  %v125 = vsel %vm45, %v124, 0.0
  %126 = vadd.xlane.f32.xlu0 %v125
  %v127 = vpop.xlane.xlu0 %126
  %v128 = vlaneseq
  %v129 = vshrl.u32 %v128, 7
  %v130 = vsub.s32 0, %v129
  %v131 = vrot.slane %v16, %v130
  %v132 = vadd.f32 %v127, %v131
  %vm133 = vcmask 7168
  %134 = vst.msk [vmem:[%s2] sm:$0xff] %vm133, %v132
  // Predicated region
  $region10: #{policy_forward.1} parent=0 // pred_check
    _
  $region11: #{policy_forward.1} parent=0 // pred_check_branch
    %136 = sbr.rel (0) target = $region13
  $region12: #{policy_forward.1} parent=0 // pred_region
    _
  $region13: #{policy_forward.1} parent=0 // pred_fallthru
    _
  // Predicated region
  $region14: #{policy_forward.1} parent=0 // pred_check
    _
  $region15: #{policy_forward.1} parent=0 // pred_check_branch
    %138 = sbr.rel (0) target = $region17
  $region16: #{policy_forward.1} parent=0 // pred_region
    _
  $region17: #{policy_forward.1} parent=0 // pred_fallthru
    _

</llo_original>
